<compile_context>
chip_gen: v5e
topology: v5e:2x2
jax: 0.10.0
libtpu: 0.0.40
codegen_flags: <defaults>
</compile_context>

<pallas_src>
import numpy as np
import jax
import jax.numpy as jnp
from jax.experimental import pallas as pl
from jax.experimental.pallas import tpu as pltpu

BN_EPS = 1e-5


def _row_tile(r):
    """Largest row tile <= 512 that divides R (lane axis, multiple of 128)."""
    for t in (512, 256, 128):
        if r % t == 0:
            return t
    return r  # tiny volumes: single full block


# ----------------------------------------------------------------------------
# Conv3d(3x3x3, pad=1, no bias), transposed/lane-dense matmul + partial BN stats
# ----------------------------------------------------------------------------
def _conv_stats_kernel(cols_ref, w_ref, y_ref, stats_ref):
    # cols_ref: (27*Cin, TR) bf16 ; w_ref: (Cout, 27*Cin) bf16
    acc = jnp.dot(w_ref[...], cols_ref[...],
                  preferred_element_type=jnp.float32)          # (Cout, TR) f32
    y_ref[...] = acc                                           # lane-dense store
    s = jnp.sum(acc, axis=1, keepdims=True)                    # (Cout, 1) lane reduce
    sq = jnp.sum(acc * acc, axis=1, keepdims=True)             # (Cout, 1)
    stats_ref[0] = jnp.concatenate([s, sq], axis=1)            # (Cout, 2) partial stats


def _bn_relu_kernel(y_ref, sc_ref, sh_ref, o_ref):
    # y: (Cout, TR); sc/sh: (Cout, 1) broadcast along lanes
    o_ref[...] = jnp.maximum(y_ref[...] * sc_ref[...] + sh_ref[...], 0.0)


def conv3d_stats(x, weight, gamma, beta):
    """x: (Cin, B, D, H, W) f32; weight: (Cout, Cin, 3, 3, 3) torch layout.
    Returns pre-BN conv output y (Cout, R) f32 plus folded BN scale/shift
    (training-mode batch statistics, biased variance, eps=1e-5)."""
    Cin, B, D, H, W = x.shape
    Cout = weight.shape[0]
    R = B * D * H * W

    # im2col glue (pure data movement), emitted directly transposed + bf16.
    xp = jnp.pad(x, ((0, 0), (0, 0), (1, 1), (1, 1), (1, 1)))
    patches = [xp[:, :, kd:kd + D, kh:kh + H, kw:kw + W]
               for kd in range(3) for kh in range(3) for kw in range(3)]
    cols = jnp.stack(patches, axis=0).reshape(27 * Cin, R).astype(jnp.bfloat16)
    # (Cout, Cin, kd, kh, kw) -> (Cout, kd, kh, kw, Cin) -> (Cout, 27*Cin)
    w_t = jnp.transpose(weight, (0, 2, 3, 4, 1)).reshape(Cout, 27 * Cin)
    w_t = w_t.astype(jnp.bfloat16)

    tr = _row_tile(R)
    nt = R // tr

    y, stats = pl.pallas_call(
        _conv_stats_kernel,
        grid=(nt,),
        in_specs=[pl.BlockSpec((27 * Cin, tr), lambda i: (0, i)),
                  pl.BlockSpec((Cout, 27 * Cin), lambda i: (0, 0))],
        out_specs=[pl.BlockSpec((Cout, tr), lambda i: (0, i)),
                   pl.BlockSpec((1, Cout, 2), lambda i: (i, 0, 0))],
        out_shape=[jax.ShapeDtypeStruct((Cout, R), jnp.float32),
                   jax.ShapeDtypeStruct((nt, Cout, 2), jnp.float32)],
        compiler_params=pltpu.CompilerParams(
            dimension_semantics=("parallel",)),
    )(cols, w_t)

    # Global BN reduction over ALL rows (tiny (Cout,)-sized math, f32).
    tot = jnp.sum(stats, axis=0)                       # (Cout, 2)
    mean = tot[:, 0] / R
    var = jnp.maximum(tot[:, 1] / R - mean * mean, 0.0)    # biased (training mode)
    scale = gamma * jax.lax.rsqrt(var + BN_EPS)
    shift = beta - mean * scale
    return y, scale, shift, (Cout, B, D, H, W)


def bn_relu_finalize(y, scale, shift, dims):
    """Standalone BN+ReLU epilogue (used when no upsample follows)."""
    Cout, B, D, H, W = dims
    R = B * D * H * W
    tr = _row_tile(R)
    nt = R // tr
    out = pl.pallas_call(
        _bn_relu_kernel,
        grid=(nt,),
        in_specs=[pl.BlockSpec((Cout, tr), lambda i: (0, i)),
                  pl.BlockSpec((Cout, 1), lambda i: (0, 0)),
                  pl.BlockSpec((Cout, 1), lambda i: (0, 0))],
        out_specs=pl.BlockSpec((Cout, tr), lambda i: (0, i)),
        out_shape=jax.ShapeDtypeStruct((Cout, R), jnp.float32),
        compiler_params=pltpu.CompilerParams(
            dimension_semantics=("parallel",)),
    )(y, scale.reshape(Cout, 1), shift.reshape(Cout, 1))
    return out.reshape(Cout, B, D, H, W)


def conv3d_bn_relu(x, weight, gamma, beta):
    y, scale, shift, dims = conv3d_stats(x, weight, gamma, beta)
    return bn_relu_finalize(y, scale, shift, dims)


# ----------------------------------------------------------------------------
# BN+ReLU epilogue fused with nn.Upsample(scale_factor=2, mode='trilinear',
# align_corners=False), implemented as SEPARABLE interpolation:
#   out = M_D (2D,D) @ x (D, H*W) @ kron(M_H, M_W)^T (H*W, 4*H*W)
# ----------------------------------------------------------------------------
def _interp_matrix_1d(n):
    """1-D linear x2 interpolation matrix, align_corners=False (torch)."""
    m = np.zeros((2 * n, n), dtype=np.float32)
    for o in range(2 * n):
        real = max(0.5 * o - 0.25, 0.0)
        i0 = int(np.floor(real))
        i1 = min(i0 + 1, n - 1)
        w1 = real - i0
        m[o, i0] += 1.0 - w1
        m[o, i1] += w1
    return m


def _bnrelu_upsample_kernel(x_ref, sc_ref, sh_ref, md_ref, mhwT_ref, o_ref):
    # x_ref: (1, D, H*W) pre-BN conv output for one (channel, batch) pair.
    xn = jnp.maximum(x_ref[0] * sc_ref[0] + sh_ref[0], 0.0)          # (D, HW)
    t = jnp.dot(md_ref[...], xn, preferred_element_type=jnp.float32)  # (2D, HW)
    o_ref[0] = jnp.dot(t, mhwT_ref[...],
                       preferred_element_type=jnp.float32)            # (2D, 4HW)


def bn_relu_upsample_x2(y, scale, shift, dims):
    """y: pre-BN conv output (C, R).  Returns (C, B, 2D, 2H, 2W) post BN+ReLU
    and trilinear x2 upsampling."""
    C, B, D, H, W = dims
    CB = C * B
    x3 = y.reshape(CB, D, H * W)
    sc = jnp.repeat(scale, B).reshape(CB, 1, 1)
    sh = jnp.repeat(shift, B).reshape(CB, 1, 1)
    m_d = jnp.asarray(_interp_matrix_1d(D))                                     # (2D, D)
    m_hwT = jnp.asarray(np.kron(_interp_matrix_1d(H), _interp_matrix_1d(W)).T)  # (HW, 4HW)

    out = pl.pallas_call(
        _bnrelu_upsample_kernel,
        grid=(CB,),
        in_specs=[pl.BlockSpec((1, D, H * W), lambda i: (i, 0, 0)),
                  pl.BlockSpec((1, 1, 1), lambda i: (i, 0, 0)),
                  pl.BlockSpec((1, 1, 1), lambda i: (i, 0, 0)),
                  pl.BlockSpec((2 * D, D), lambda i: (0, 0)),
                  pl.BlockSpec((H * W, 4 * H * W), lambda i: (0, 0))],
        out_specs=pl.BlockSpec((1, 2 * D, 4 * H * W), lambda i: (i, 0, 0)),
        out_shape=jax.ShapeDtypeStruct((CB, 2 * D, 4 * H * W), jnp.float32),
        compiler_params=pltpu.CompilerParams(
            dimension_semantics=("parallel",)),
    )(x3, sc, sh, m_d, m_hwT)
    return out.reshape(C, B, 2 * D, 2 * H, 2 * W)


# ----------------------------------------------------------------------------
# DecoderCup configuration, parameters, forward
# ----------------------------------------------------------------------------
class Config:
    hidden_size = 32
    conv_first_channel = 16
    decoder_channels = (8, 4)
    skip_channels = (0, 0)
    n_skip = 0
    down_factor = 2
    down_num = 2
    patches = {"size": (2, 2, 2)}


def init_params(key, cfg):
    head = cfg.conv_first_channel
    in_channels = [head] + list(cfg.decoder_channels[:-1])
    out_channels = list(cfg.decoder_channels)
    layer_specs = [("conv_more", cfg.hidden_size, head)]
    for i, (ic, oc, sc) in enumerate(zip(in_channels, out_channels, cfg.skip_channels)):
        layer_specs.append((f"block{i}_conv1", ic + sc, oc))
        layer_specs.append((f"block{i}_conv2", oc, oc))

    params = {}
    for name, cin, cout in layer_specs:
        key, k1, k2, k3 = jax.random.split(key, 4)
        params[name] = dict(
            weight=0.1 * jax.random.normal(k1, (cout, cin, 3, 3, 3), jnp.float32),
            gamma=1.0 + 0.1 * jax.random.normal(k2, (cout,), jnp.float32),
            beta=0.1 * jax.random.normal(k3, (cout,), jnp.float32),
        )
    return params


def decoder_cup_forward(params, hidden_states, cfg, img_size, features=None):
    B, n_patch, hidden = hidden_states.shape
    f = cfg.down_factor ** cfg.down_num
    pz = cfg.patches["size"]
    l = img_size[0] // f // pz[0]
    h = img_size[1] // f // pz[1]
    w = img_size[2] // f // pz[2]
    assert n_patch == l * h * w and hidden == cfg.hidden_size

    # PyTorch: permute(0,2,1).view(B, hidden, l, h, w)  (NCDHW).
    # We carry (C, B, D, H, W) internally (spatial flattened onto lanes).
    x = jnp.transpose(hidden_states, (2, 0, 1)).reshape(hidden, B, l, h, w)

    p = params["conv_more"]
    y, sc, sh, dims = conv3d_stats(x, p["weight"], p["gamma"], p["beta"])

    for i in range(len(cfg.decoder_channels)):
        # BN+ReLU of the preceding conv is fused into the upsample kernel.
        x = bn_relu_upsample_x2(y, sc, sh, dims)
        skip = features[i] if (features is not None and i < cfg.n_skip) else None
        if skip is not None:
            # skip assumed NCDHW -> (C, B, D, H, W), concat along channels
            x = jnp.concatenate([x, jnp.transpose(skip, (1, 0, 2, 3, 4))], axis=0)
        p1 = params[f"block{i}_conv1"]
        x = conv3d_bn_relu(x, p1["weight"], p1["gamma"], p1["beta"])
        p2 = params[f"block{i}_conv2"]
        y, sc, sh, dims = conv3d_stats(x, p2["weight"], p2["gamma"], p2["beta"])

    # Last conv2 has no following upsample: standalone BN+ReLU epilogue.
    x = bn_relu_finalize(y, sc, sh, dims)

    # Return in PyTorch's NCDHW layout.
    return jnp.transpose(x, (1, 0, 2, 3, 4))


if __name__ == "__main__":
    cfg = Config()
    img_size = (16, 16, 16)
    B = 2
    f = cfg.down_factor ** cfg.down_num
    l = img_size[0] // f // cfg.patches["size"][0]
    h = img_size[1] // f // cfg.patches["size"][1]
    w = img_size[2] // f // cfg.patches["size"][2]
    n_patch = l * h * w  # = 8

    key = jax.random.PRNGKey(0)
    key, kx = jax.random.split(key)
    hidden_states = jax.random.normal(kx, (B, n_patch, cfg.hidden_size), jnp.float32)
    params = init_params(key, cfg)

    out = decoder_cup_forward(params, hidden_states, cfg, img_size, features=None)
    out = jax.block_until_ready(out)

    expected_spatial = (l * 2 ** len(cfg.decoder_channels),
                        h * 2 ** len(cfg.decoder_channels),
                        w * 2 ** len(cfg.decoder_channels))
    assert out.shape == (B, cfg.decoder_channels[-1]) + expected_spatial, out.shape
    assert bool(jnp.all(jnp.isfinite(out)))
    print("KERNEL_OK")
</pallas_src>

<mosaic_0001>
module attributes {stable_mosaic.version = 11 : i64} {
  func.func @_conv_stats_kernel(%arg0: i32, %arg1: memref<864x16xbf16, #tpu.memory_space<vmem>>, %arg2: memref<16x864xbf16, #tpu.memory_space<vmem>>, %arg3: memref<16x16xf32, #tpu.memory_space<vmem>>, %arg4: memref<1x16x2xf32, #tpu.memory_space<vmem>>) attributes {dimension_semantics = [#tpu.dimension_semantics<parallel>], iteration_bounds = array<i64: 1>, scalar_prefetch = 0 : i64, scratch_operands = 0 : i64, tpu.core_type = #tpu.core_type<tc>, window_params = [{transform_indices = @transform_0, window_bounds = array<i64: 864, 16>}, {pipeline_mode = #tpu.pipeline_mode<synchronous>, transform_indices = @transform_1, window_bounds = array<i64: 16, 864>}, {transform_indices = @transform_2, window_bounds = array<i64: 16, 16>}, {transform_indices = @transform_3, window_bounds = array<i64: 1, 16, 2>}]} {
    %c0 = arith.constant 0 : index
    %c0_0 = arith.constant 0 : index
    %0 = vector.load %arg2[%c0, %c0_0] : memref<16x864xbf16, #tpu.memory_space<vmem>>, vector<16x864xbf16>
    %c0_1 = arith.constant 0 : index
    %c0_2 = arith.constant 0 : index
    %1 = vector.load %arg1[%c0_1, %c0_2] : memref<864x16xbf16, #tpu.memory_space<vmem>>, vector<864x16xbf16>
    %cst = arith.constant dense<0.000000e+00> : vector<16x16xf32>
    %2 = tpu.matmul %0, %1, %cst {dimension_numbers = #tpu.dot_dimension_numbers<[1], [0], [0], [1], [0, 0, 1, 1], [], []>} : vector<16x864xbf16>, vector<864x16xbf16>, vector<16x16xf32> -> vector<16x16xf32>
    %c0_3 = arith.constant 0 : index
    %c0_4 = arith.constant 0 : index
    %3 = vector.load %arg3[%c0_3, %c0_4] : memref<16x16xf32, #tpu.memory_space<vmem>>, vector<16x16xf32>
    tpu.vector_store %arg3[%c0_3, %c0_4], %2 {strides = array<i32>} : memref<16x16xf32, #tpu.memory_space<vmem>>, vector<16x16xf32>,
    %cst_5 = arith.constant dense<0.000000e+00> : vector<16xf32>
    %4 = vector.multi_reduction <add>, %2, %cst_5 [1] : vector<16x16xf32> to vector<16xf32>
    %5 = vector.shape_cast %4 : vector<16xf32> to vector<16x1xf32>
    %6 = arith.mulf %2, %2 : vector<16x16xf32>
    %cst_6 = arith.constant dense<0.000000e+00> : vector<16xf32>
    %7 = vector.multi_reduction <add>, %6, %cst_6 [1] : vector<16x16xf32> to vector<16xf32>
    %8 = vector.shape_cast %7 : vector<16xf32> to vector<16x1xf32>
    %9 = tpu.concatenate %5, %8 in 1 : vector<16x1xf32>, vector<16x1xf32> -> vector<16x2xf32>
    %c0_7 = arith.constant 0 : index
    %c0_8 = arith.constant 0 : index
    %c0_9 = arith.constant 0 : index
    %10 = vector.load %arg4[%c0_7, %c0_8, %c0_9] : memref<1x16x2xf32, #tpu.memory_space<vmem>>, vector<1x16x2xf32>
    %11 = vector.shape_cast %10 : vector<1x16x2xf32> to vector<16x2xf32>
    %12 = vector.shape_cast %9 : vector<16x2xf32> to vector<1x16x2xf32>
    tpu.vector_store %arg4[%c0_7, %c0_8, %c0_9], %12 {strides = array<i32>} : memref<1x16x2xf32, #tpu.memory_space<vmem>>, vector<1x16x2xf32>,
    return
  }
  func.func @transform_0(%arg0: i32) -> (i32, i32) {
    %c0_i32 = arith.constant 0 : i32
    %c0_i32_0 = arith.constant 0 : i32
    return %c0_i32, %arg0 : i32, i32
  }
  func.func @transform_1(%arg0: i32) -> (i32, i32) {
    %c0_i32 = arith.constant 0 : i32
    %c0_i32_0 = arith.constant 0 : i32
    %c0_i32_1 = arith.constant 0 : i32
    return %c0_i32, %c0_i32_0 : i32, i32
  }
  func.func @transform_2(%arg0: i32) -> (i32, i32) {
    %c0_i32 = arith.constant 0 : i32
    %c0_i32_0 = arith.constant 0 : i32
    return %c0_i32, %arg0 : i32, i32
  }
  func.func @transform_3(%arg0: i32) -> (i32, i32, i32) {
    %c0_i32 = arith.constant 0 : i32
    %c0_i32_0 = arith.constant 0 : i32
    %c0_i32_1 = arith.constant 0 : i32
    return %arg0, %c0_i32, %c0_i32_0 : i32, i32, i32
  }
}

</mosaic_0001>

<llo_original>
// kernel: tpu_custom_call.1
$region0: #{tpu_custom_call.1}
  #allocation0 [shape = 'u32[]', space=smem, size = 0x4, offset = 0x4, fixed_abs, tag = 'smem constant byte address 0x4 - core index']
  #allocation1 [shape = 'u32[72,128]{1,0:T(1,128)}', space=vmem, size = 0x9000, scoped, tag = 'internal scratch']
  %s0 = inlined_call_operand.vmem [shape: bf16[864,16], index: 0, kind: input, shape index: {}]
  %s1 = inlined_call_operand.vmem [shape: bf16[16,864], index: 1, kind: input, shape index: {}]
  %s2 = inlined_call_operand.hbm [shape: f32[16,16], index: 2, kind: output, shape index: {0}]
  %s3 = inlined_call_operand.vmem [shape: f32[1,16,2], index: 3, kind: output, shape index: {1}]
  %4 = xla_tuple %s2, %s3
  %s5 = sld [smem:[#allocation0]]
  $region26: #{tpu_custom_call.1} parent=0
    _
  %s7 = ssub.s32 1, %s5
  %s8 = scalar_select 0, %s7, %s5
  $region1: #{tpu_custom_call.1} parent=0
    #allocation2 [shape = 'u8[8192]{0}', space=vmem, size = 0x2000, scoped, tag = 'output window, operand 0, single buffered']
    #allocation3 [shape = 's32[1]{0}', space=sflag, size = 0x4, scoped, tag = 'scoped memory for tpu_custom_call.1']
    %9 = vsyncpa [#allocation3], 0
    // Predicated region
    $region2: #{tpu_custom_call.1} parent=1 // pred_check
      _
    $region3: #{tpu_custom_call.1} parent=1 // pred_check_branch
      %11 = sbr.rel (0) target = $region5
    $region4: #{tpu_custom_call.1} parent=1 // pred_region
      _
    $region5: #{tpu_custom_call.1} parent=1 // pred_fallthru
      _
    // Predicated region
    $region6: #{tpu_custom_call.1} parent=1 // pred_check
      _
    $region7: #{tpu_custom_call.1} parent=1 // pred_check_branch
      %13 = sbr.rel (0) target = $region9
    $region8: #{tpu_custom_call.1} parent=1 // pred_region
      _
    $region9: #{tpu_custom_call.1} parent=1 // pred_fallthru
      _
    %v15 = vld [vmem:[%s1] sm:$0xff]
    %v16 = vld [vmem:[%s1 + $0x8] sm:$0xff]
    %v17 = vld [vmem:[%s1 + $0x10] sm:$0xff]
    %v18 = vld [vmem:[%s1 + $0x18] sm:$0xf]
    %v19 = vld [vmem:[%s1 + $0x1c] sm:$0xff]
    %v20 = vld [vmem:[%s1 + $0x24] sm:$0xff]
    %v21 = vld [vmem:[%s1 + $0x2c] sm:$0xff]
    %v22 = vld [vmem:[%s1 + $0x34] sm:$0xf]
    %v23 = vld [vmem:[%s0] sm:$0xf]
    %v24 = vld [vmem:[%s0 + $0x4] sm:$0xf]
    %v25 = vld [vmem:[%s0 + $0x8] sm:$0xf]
    %v26 = vld [vmem:[%s0 + $0xc] sm:$0xf]
    %v27 = vld [vmem:[%s0 + $0x10] sm:$0xf]
    %v28 = vld [vmem:[%s0 + $0x14] sm:$0xf]
    %v29 = vld [vmem:[%s0 + $0x18] sm:$0xf]
    %v30 = vld [vmem:[%s0 + $0x1c] sm:$0xf]
    %v31 = vld [vmem:[%s0 + $0x20] sm:$0xf]
    %v32 = vld [vmem:[%s0 + $0x24] sm:$0xf]
    %v33 = vld [vmem:[%s0 + $0x28] sm:$0xf]
    %v34 = vld [vmem:[%s0 + $0x2c] sm:$0xf]
    %v35 = vld [vmem:[%s0 + $0x30] sm:$0xf]
    %v36 = vld [vmem:[%s0 + $0x34] sm:$0xf]
    %v37 = vld [vmem:[%s0 + $0x38] sm:$0xf]
    %v38 = vld [vmem:[%s0 + $0x3c] sm:$0xf]
    %v39 = vld [vmem:[%s0 + $0x40] sm:$0xf]
    %v40 = vld [vmem:[%s0 + $0x44] sm:$0xf]
    %v41 = vld [vmem:[%s0 + $0x48] sm:$0xf]
    %v42 = vld [vmem:[%s0 + $0x4c] sm:$0xf]
    %v43 = vld [vmem:[%s0 + $0x50] sm:$0xf]
    %v44 = vld [vmem:[%s0 + $0x54] sm:$0xf]
    %v45 = vld [vmem:[%s0 + $0x58] sm:$0xf]
    %v46 = vld [vmem:[%s0 + $0x5c] sm:$0xf]
    %v47 = vld [vmem:[%s0 + $0x60] sm:$0xf]
    %v48 = vld [vmem:[%s0 + $0x64] sm:$0xf]
    %v49 = vld [vmem:[%s0 + $0x68] sm:$0xf]
    %v50 = vld [vmem:[%s0 + $0x6c] sm:$0xf]
    %v51 = vld [vmem:[%s0 + $0x70] sm:$0xf]
    %v52 = vld [vmem:[%s0 + $0x74] sm:$0xf]
    %v53 = vld [vmem:[%s0 + $0x78] sm:$0xf]
    %v54 = vld [vmem:[%s0 + $0x7c] sm:$0xf]
    %v55 = vld [vmem:[%s0 + $0x80] sm:$0xf]
    %v56 = vld [vmem:[%s0 + $0x84] sm:$0xf]
    %v57 = vld [vmem:[%s0 + $0x88] sm:$0xf]
    %v58 = vld [vmem:[%s0 + $0x8c] sm:$0xf]
    %v59 = vld [vmem:[%s0 + $0x90] sm:$0xf]
    %v60 = vld [vmem:[%s0 + $0x94] sm:$0xf]
    %v61 = vld [vmem:[%s0 + $0x98] sm:$0xf]
    %v62 = vld [vmem:[%s0 + $0x9c] sm:$0xf]
    %v63 = vld [vmem:[%s0 + $0xa0] sm:$0xf]
    %v64 = vld [vmem:[%s0 + $0xa4] sm:$0xf]
    %v65 = vld [vmem:[%s0 + $0xa8] sm:$0xf]
    %v66 = vld [vmem:[%s0 + $0xac] sm:$0xf]
    %v67 = vld [vmem:[%s0 + $0xb0] sm:$0xf]
    %v68 = vld [vmem:[%s0 + $0xb4] sm:$0xf]
    %v69 = vld [vmem:[%s0 + $0xb8] sm:$0xf]
    %v70 = vld [vmem:[%s0 + $0xbc] sm:$0xf]
    %v71 = vld [vmem:[%s0 + $0xc0] sm:$0xf]
    %v72 = vld [vmem:[%s0 + $0xc4] sm:$0xf]
    %v73 = vld [vmem:[%s0 + $0xc8] sm:$0xf]
    %v74 = vld [vmem:[%s0 + $0xcc] sm:$0xf]
    %v75 = vld [vmem:[%s0 + $0xd0] sm:$0xf]
    %v76 = vld [vmem:[%s0 + $0xd4] sm:$0xf]
    %v77 = vld [vmem:[%s0 + $0xd8] sm:$0xf]
    %v78 = vld [vmem:[%s0 + $0xdc] sm:$0xf]
    %v79 = vld [vmem:[%s0 + $0xe0] sm:$0xf]
    %v80 = vld [vmem:[%s0 + $0xe4] sm:$0xf]
    %v81 = vld [vmem:[%s0 + $0xe8] sm:$0xf]
    %v82 = vld [vmem:[%s0 + $0xec] sm:$0xf]
    %v83 = vld [vmem:[%s0 + $0xf0] sm:$0xf]
    %v84 = vld [vmem:[%s0 + $0xf4] sm:$0xf]
    %v85 = vld [vmem:[%s0 + $0xf8] sm:$0xf]
    %v86 = vld [vmem:[%s0 + $0xfc] sm:$0xf]
    %v87 = vld [vmem:[%s0 + $0x100] sm:$0xf]
    %v88 = vld [vmem:[%s0 + $0x104] sm:$0xf]
    %v89 = vld [vmem:[%s0 + $0x108] sm:$0xf]
    %v90 = vld [vmem:[%s0 + $0x10c] sm:$0xf]
    %v91 = vld [vmem:[%s0 + $0x110] sm:$0xf]
    %v92 = vld [vmem:[%s0 + $0x114] sm:$0xf]
    %v93 = vld [vmem:[%s0 + $0x118] sm:$0xf]
    %v94 = vld [vmem:[%s0 + $0x11c] sm:$0xf]
    %v95 = vld [vmem:[%s0 + $0x120] sm:$0xf]
    %v96 = vld [vmem:[%s0 + $0x124] sm:$0xf]
    %v97 = vld [vmem:[%s0 + $0x128] sm:$0xf]
    %v98 = vld [vmem:[%s0 + $0x12c] sm:$0xf]
    %v99 = vld [vmem:[%s0 + $0x130] sm:$0xf]
    %v100 = vld [vmem:[%s0 + $0x134] sm:$0xf]
    %v101 = vld [vmem:[%s0 + $0x138] sm:$0xf]
    %v102 = vld [vmem:[%s0 + $0x13c] sm:$0xf]
    %v103 = vld [vmem:[%s0 + $0x140] sm:$0xf]
    %v104 = vld [vmem:[%s0 + $0x144] sm:$0xf]
    %v105 = vld [vmem:[%s0 + $0x148] sm:$0xf]
    %v106 = vld [vmem:[%s0 + $0x14c] sm:$0xf]
    %v107 = vld [vmem:[%s0 + $0x150] sm:$0xf]
    %v108 = vld [vmem:[%s0 + $0x154] sm:$0xf]
    %v109 = vld [vmem:[%s0 + $0x158] sm:$0xf]
    %v110 = vld [vmem:[%s0 + $0x15c] sm:$0xf]
    %v111 = vld [vmem:[%s0 + $0x160] sm:$0xf]
    %v112 = vld [vmem:[%s0 + $0x164] sm:$0xf]
    %v113 = vld [vmem:[%s0 + $0x168] sm:$0xf]
    %v114 = vld [vmem:[%s0 + $0x16c] sm:$0xf]
    %v115 = vld [vmem:[%s0 + $0x170] sm:$0xf]
    %v116 = vld [vmem:[%s0 + $0x174] sm:$0xf]
    %v117 = vld [vmem:[%s0 + $0x178] sm:$0xf]
    %v118 = vld [vmem:[%s0 + $0x17c] sm:$0xf]
    %v119 = vld [vmem:[%s0 + $0x180] sm:$0xf]
    %v120 = vld [vmem:[%s0 + $0x184] sm:$0xf]
    %v121 = vld [vmem:[%s0 + $0x188] sm:$0xf]
    %v122 = vld [vmem:[%s0 + $0x18c] sm:$0xf]
    %v123 = vld [vmem:[%s0 + $0x190] sm:$0xf]
    %v124 = vld [vmem:[%s0 + $0x194] sm:$0xf]
    %v125 = vld [vmem:[%s0 + $0x198] sm:$0xf]
    %v126 = vld [vmem:[%s0 + $0x19c] sm:$0xf]
    %v127 = vld [vmem:[%s0 + $0x1a0] sm:$0xf]
    %v128 = vld [vmem:[%s0 + $0x1a4] sm:$0xf]
    %v129 = vld [vmem:[%s0 + $0x1a8] sm:$0xf]
    %v130 = vld [vmem:[%s0 + $0x1ac] sm:$0xf]
    %v139 = vunpack.c.l.b16 %v15
    %v140 = vunpack.c.h.b16 %v15
    %v141 = vunpack.c.l.b16 %v16
    %v142 = vunpack.c.h.b16 %v16
    %v143 = vunpack.c.l.b16 %v17
    %v144 = vunpack.c.h.b16 %v17
    %v145 = vunpack.c.l.b16 %v18
    %v146 = vunpack.c.l.b16 %v19
    %v147 = vunpack.c.h.b16 %v19
    %v148 = vunpack.c.l.b16 %v20
    %v149 = vunpack.c.h.b16 %v20
    %v150 = vunpack.c.l.b16 %v21
    %v151 = vunpack.c.h.b16 %v21
    %v152 = vunpack.c.l.b16 %v22
    %v153 = vpack.c.b16 %v146, %v139
    %v154 = vpack.c.b16 %v147, %v140
    %v155 = vpack.c.b16 %v148, %v141
    %v156 = vpack.c.b16 %v149, %v142
    %v157 = vpack.c.b16 %v150, %v143
    %v158 = vpack.c.b16 %v151, %v144
    %v159 = vpack.c.b16 %v152, %v145
    %v274 = vunpack.c.l.b16 %v23
    %v275 = vunpack.c.l.b16 %v24
    %v276 = vunpack.c.l.b16 %v25
    %v277 = vunpack.c.l.b16 %v26
    %v278 = vunpack.c.l.b16 %v27
    %v279 = vunpack.c.l.b16 %v28
    %v280 = vunpack.c.l.b16 %v29
    %v281 = vunpack.c.l.b16 %v30
    %v282 = vunpack.c.l.b16 %v31
    %v283 = vunpack.c.l.b16 %v32
    %v284 = vunpack.c.l.b16 %v33
    %v285 = vunpack.c.l.b16 %v34
    %v286 = vunpack.c.l.b16 %v35
    %v287 = vunpack.c.l.b16 %v36
    %v288 = vunpack.c.l.b16 %v37
    %v289 = vunpack.c.l.b16 %v38
    %v290 = vunpack.c.l.b16 %v39
    %v291 = vunpack.c.l.b16 %v40
    %v292 = vunpack.c.l.b16 %v41
    %v293 = vunpack.c.l.b16 %v42
    %v294 = vunpack.c.l.b16 %v43
    %v295 = vunpack.c.l.b16 %v44
    %v296 = vunpack.c.l.b16 %v45
    %v297 = vunpack.c.l.b16 %v46
    %v298 = vunpack.c.l.b16 %v47
    %v299 = vunpack.c.l.b16 %v48
    %v300 = vunpack.c.l.b16 %v49
    %v301 = vunpack.c.l.b16 %v50
    %v302 = vunpack.c.l.b16 %v51
    %v303 = vunpack.c.l.b16 %v52
    %v304 = vunpack.c.l.b16 %v53
    %v305 = vunpack.c.l.b16 %v54
    %v306 = vunpack.c.l.b16 %v55
    %v307 = vunpack.c.l.b16 %v56
    %v308 = vunpack.c.l.b16 %v57
    %v309 = vunpack.c.l.b16 %v58
    %v310 = vunpack.c.l.b16 %v59
    %v311 = vunpack.c.l.b16 %v60
    %v312 = vunpack.c.l.b16 %v61
    %v313 = vunpack.c.l.b16 %v62
    %v314 = vunpack.c.l.b16 %v63
    %v315 = vunpack.c.l.b16 %v64
    %v316 = vunpack.c.l.b16 %v65
    %v317 = vunpack.c.l.b16 %v66
    %v318 = vunpack.c.l.b16 %v67
    %v319 = vunpack.c.l.b16 %v68
    %v320 = vunpack.c.l.b16 %v69
    %v321 = vunpack.c.l.b16 %v70
    %v322 = vunpack.c.l.b16 %v71
    %v323 = vunpack.c.l.b16 %v72
    %v324 = vunpack.c.l.b16 %v73
    %v325 = vunpack.c.l.b16 %v74
    %v326 = vunpack.c.l.b16 %v75
    %v327 = vunpack.c.l.b16 %v76
    %v328 = vunpack.c.l.b16 %v77
    %v329 = vunpack.c.l.b16 %v78
    %v330 = vunpack.c.l.b16 %v79
    %v331 = vunpack.c.l.b16 %v80
    %v332 = vunpack.c.l.b16 %v81
    %v333 = vunpack.c.l.b16 %v82
    %v334 = vunpack.c.l.b16 %v83
    %v335 = vunpack.c.l.b16 %v84
    %v336 = vunpack.c.l.b16 %v85
    %v337 = vunpack.c.l.b16 %v86
    %v338 = vunpack.c.l.b16 %v87
    %v339 = vunpack.c.l.b16 %v88
    %v340 = vunpack.c.l.b16 %v89
    %v341 = vunpack.c.l.b16 %v90
    %v342 = vunpack.c.l.b16 %v91
    %v343 = vunpack.c.l.b16 %v92
    %v344 = vunpack.c.l.b16 %v93
    %v345 = vunpack.c.l.b16 %v94
    %v346 = vunpack.c.l.b16 %v95
    %v347 = vunpack.c.l.b16 %v96
    %v348 = vunpack.c.l.b16 %v97
    %v349 = vunpack.c.l.b16 %v98
    %v350 = vunpack.c.l.b16 %v99
    %v351 = vunpack.c.l.b16 %v100
    %v352 = vunpack.c.l.b16 %v101
    %v353 = vunpack.c.l.b16 %v102
    %v354 = vunpack.c.l.b16 %v103
    %v355 = vunpack.c.l.b16 %v104
    %v356 = vunpack.c.l.b16 %v105
    %v357 = vunpack.c.l.b16 %v106
    %v358 = vunpack.c.l.b16 %v107
    %v359 = vunpack.c.l.b16 %v108
    %v360 = vunpack.c.l.b16 %v109
    %v361 = vunpack.c.l.b16 %v110
    %v362 = vunpack.c.l.b16 %v111
    %v363 = vunpack.c.l.b16 %v112
    %v364 = vunpack.c.l.b16 %v113
    %v365 = vunpack.c.l.b16 %v114
    %v366 = vunpack.c.l.b16 %v115
    %v367 = vunpack.c.l.b16 %v116
    %v368 = vunpack.c.l.b16 %v117
    %v369 = vunpack.c.l.b16 %v118
    %v370 = vunpack.c.l.b16 %v119
    %v371 = vunpack.c.l.b16 %v120
    %v372 = vunpack.c.l.b16 %v121
    %v373 = vunpack.c.l.b16 %v122
    %v374 = vunpack.c.l.b16 %v123
    %v375 = vunpack.c.l.b16 %v124
    %v376 = vunpack.c.l.b16 %v125
    %v377 = vunpack.c.l.b16 %v126
    %v378 = vunpack.c.l.b16 %v127
    %v379 = vunpack.c.l.b16 %v128
    %v380 = vunpack.c.l.b16 %v129
    %v381 = vunpack.c.l.b16 %v130
    %v382 = vpack.c.b16 %v275, %v274
    %v383 = vpack.c.b16 %v277, %v276
    %v384 = vpack.c.b16 %v279, %v278
    %v385 = vpack.c.b16 %v281, %v280
    %v386 = vpack.c.b16 %v283, %v282
    %v387 = vpack.c.b16 %v285, %v284
    %v388 = vpack.c.b16 %v287, %v286
    %v389 = vpack.c.b16 %v289, %v288
    %v390 = vpack.c.b16 %v291, %v290
    %v391 = vpack.c.b16 %v293, %v292
    %v392 = vpack.c.b16 %v295, %v294
    %v393 = vpack.c.b16 %v297, %v296
    %v394 = vpack.c.b16 %v299, %v298
    %v395 = vpack.c.b16 %v301, %v300
    %v396 = vpack.c.b16 %v303, %v302
    %v397 = vpack.c.b16 %v305, %v304
    %v398 = vpack.c.b16 %v307, %v306
    %v399 = vpack.c.b16 %v309, %v308
    %v400 = vpack.c.b16 %v311, %v310
    %v401 = vpack.c.b16 %v313, %v312
    %v402 = vpack.c.b16 %v315, %v314
    %v403 = vpack.c.b16 %v317, %v316
    %v404 = vpack.c.b16 %v319, %v318
    %v405 = vpack.c.b16 %v321, %v320
    %v406 = vpack.c.b16 %v323, %v322
    %v407 = vpack.c.b16 %v325, %v324
    %v408 = vpack.c.b16 %v327, %v326
    %v409 = vpack.c.b16 %v329, %v328
    %v410 = vpack.c.b16 %v331, %v330
    %v411 = vpack.c.b16 %v333, %v332
    %v412 = vpack.c.b16 %v335, %v334
    %v413 = vpack.c.b16 %v337, %v336
    %v414 = vpack.c.b16 %v339, %v338
    %v415 = vpack.c.b16 %v341, %v340
    %v416 = vpack.c.b16 %v343, %v342
    %v417 = vpack.c.b16 %v345, %v344
    %v418 = vpack.c.b16 %v347, %v346
    %v419 = vpack.c.b16 %v349, %v348
    %v420 = vpack.c.b16 %v351, %v350
    %v421 = vpack.c.b16 %v353, %v352
    %v422 = vpack.c.b16 %v355, %v354
    %v423 = vpack.c.b16 %v357, %v356
    %v424 = vpack.c.b16 %v359, %v358
    %v425 = vpack.c.b16 %v361, %v360
    %v426 = vpack.c.b16 %v363, %v362
    %v427 = vpack.c.b16 %v365, %v364
    %v428 = vpack.c.b16 %v367, %v366
    %v429 = vpack.c.b16 %v369, %v368
    %v430 = vpack.c.b16 %v371, %v370
    %v431 = vpack.c.b16 %v373, %v372
    %v432 = vpack.c.b16 %v375, %v374
    %v433 = vpack.c.b16 %v377, %v376
    %v434 = vpack.c.b16 %v379, %v378
    %v435 = vpack.c.b16 %v381, %v380
    %vm490 = vcmask 785408
    %v492 = vsel %vm490, %v159, 0
    %494 = vmatpush.bf16.msra.mxu0 %v389
    %495 = vmatpush.bf16.msra.mxu0 %v388
    %496 = vmatpush.bf16.msra.mxu0 %v387
    %497 = vmatpush.bf16.msra.mxu0 %v386
    %498 = vmatpush.bf16.msra.mxu0 %v385
    %499 = vmatpush.bf16.msra.mxu0 %v384
    %500 = vmatpush.bf16.msra.mxu0 %v383
    %501 = vmatpush.bf16.msra.mxu0 %v382
    %502 = vmatmul.bf16.gmra.mxu0 %v153
    %v503 = vpop.f32.mrf.mxu0
    %v504 = vadd.f32 0.0, %v503
    %v505 = vpop.f32.mrf.mxu0
    %v506 = vadd.f32 0.0, %v505
    %507 = vdwg.mxu0
    %508 = vmatpush.bf16.msra.mxu0 %v397
    %509 = vmatpush.bf16.msra.mxu0 %v396
    %510 = vmatpush.bf16.msra.mxu0 %v395
    %511 = vmatpush.bf16.msra.mxu0 %v394
    %512 = vmatpush.bf16.msra.mxu0 %v393
    %513 = vmatpush.bf16.msra.mxu0 %v392
    %514 = vmatpush.bf16.msra.mxu0 %v391
    %515 = vmatpush.bf16.msra.mxu0 %v390
    %516 = vmatmul.bf16.gmra.mxu0 %v154
    %v517 = vpop.f32.mrf.mxu0
    %v518 = vadd.f32 %v504, %v517
    %v519 = vpop.f32.mrf.mxu0
    %v520 = vadd.f32 %v506, %v519
    %521 = vdwg.mxu0
    %522 = vmatpush.bf16.msra.mxu0 %v405
    %523 = vmatpush.bf16.msra.mxu0 %v404
    %524 = vmatpush.bf16.msra.mxu0 %v403
    %525 = vmatpush.bf16.msra.mxu0 %v402
    %526 = vmatpush.bf16.msra.mxu0 %v401
    %527 = vmatpush.bf16.msra.mxu0 %v400
    %528 = vmatpush.bf16.msra.mxu0 %v399
    %529 = vmatpush.bf16.msra.mxu0 %v398
    %530 = vmatmul.bf16.gmra.mxu0 %v155
    %v531 = vpop.f32.mrf.mxu0
    %v532 = vadd.f32 %v518, %v531
    %v533 = vpop.f32.mrf.mxu0
    %v534 = vadd.f32 %v520, %v533
    %535 = vdwg.mxu0
    %536 = vmatpush.bf16.msra.mxu0 %v413
    %537 = vmatpush.bf16.msra.mxu0 %v412
    %538 = vmatpush.bf16.msra.mxu0 %v411
    %539 = vmatpush.bf16.msra.mxu0 %v410
    %540 = vmatpush.bf16.msra.mxu0 %v409
    %541 = vmatpush.bf16.msra.mxu0 %v408
    %542 = vmatpush.bf16.msra.mxu0 %v407
    %543 = vmatpush.bf16.msra.mxu0 %v406
    %544 = vmatmul.bf16.gmra.mxu0 %v156
    %v545 = vpop.f32.mrf.mxu0
    %v546 = vadd.f32 %v532, %v545
    %v547 = vpop.f32.mrf.mxu0
    %v548 = vadd.f32 %v534, %v547
    %549 = vdwg.mxu0
    %550 = vmatpush.bf16.msra.mxu0 %v421
    %551 = vmatpush.bf16.msra.mxu0 %v420
    %552 = vmatpush.bf16.msra.mxu0 %v419
    %553 = vmatpush.bf16.msra.mxu0 %v418
    %554 = vmatpush.bf16.msra.mxu0 %v417
    %555 = vmatpush.bf16.msra.mxu0 %v416
    %556 = vmatpush.bf16.msra.mxu0 %v415
    %557 = vmatpush.bf16.msra.mxu0 %v414
    %558 = vmatmul.bf16.gmra.mxu0 %v157
    %v559 = vpop.f32.mrf.mxu0
    %v560 = vadd.f32 %v546, %v559
    %v561 = vpop.f32.mrf.mxu0
    %v562 = vadd.f32 %v548, %v561
    %563 = vdwg.mxu0
    %564 = vmatpush.bf16.msra.mxu0 %v429
    %565 = vmatpush.bf16.msra.mxu0 %v428
    %566 = vmatpush.bf16.msra.mxu0 %v427
    %567 = vmatpush.bf16.msra.mxu0 %v426
    %568 = vmatpush.bf16.msra.mxu0 %v425
    %569 = vmatpush.bf16.msra.mxu0 %v424
    %570 = vmatpush.bf16.msra.mxu0 %v423
    %571 = vmatpush.bf16.msra.mxu0 %v422
    %572 = vmatmul.bf16.gmra.mxu0 %v158
    %v573 = vpop.f32.mrf.mxu0
    %v574 = vadd.f32 %v560, %v573
    %v575 = vpop.f32.mrf.mxu0
    %v576 = vadd.f32 %v562, %v575
    %577 = vdwg.mxu0
    %578 = vmatpush.bf16.msra.mxu0 0
    %579 = vmatpush.bf16.msra.mxu0 0
    %580 = vmatpush.bf16.msra.mxu0 %v435
    %581 = vmatpush.bf16.msra.mxu0 %v434
    %582 = vmatpush.bf16.msra.mxu0 %v433
    %583 = vmatpush.bf16.msra.mxu0 %v432
    %584 = vmatpush.bf16.msra.mxu0 %v431
    %585 = vmatpush.bf16.msra.mxu0 %v430
    %586 = vmatmul.bf16.gmra.mxu0 %v492
    %v587 = vpop.f32.mrf.mxu0
    %v588 = vadd.f32 %v574, %v587
    %v589 = vpop.f32.mrf.mxu0
    %v590 = vadd.f32 %v576, %v589
    %591 = vdwg.mxu0
    %vm592 = vcmask 130048
    %593 = vst.msk [vmem:[#allocation2] sm:$0xff] %vm592, %v588
    %594 = vst.msk [vmem:[#allocation2 + $0x8] sm:$0xff] %vm592, %v590
    %v595 = vsel %vm592, %v588, 0.0
    %596 = vadd.xlane.f32.xlu0 %v595
    %v597 = vpop.xlane.xlu0 %596
    %v598 = vsel %vm592, %v590, 0.0
    %599 = vadd.xlane.f32.xlu0 %v598
    %v600 = vpop.xlane.xlu0 %599
    %v601 = vmul.f32 %v588, %v588
    %v602 = vmul.f32 %v590, %v590
    %v603 = vsel %vm592, %v601, 0.0
    %604 = vadd.xlane.f32.xlu0 %v603
    %v605 = vpop.xlane.xlu0 %604
    %v606 = vsel %vm592, %v602, 0.0
    %607 = vadd.xlane.f32.xlu0 %v606
    %v608 = vpop.xlane.xlu0 %607
    %vm609 = vcmask 7168
    %v610 = vsel %vm609, %v597, %v605
    %v611 = vsel %vm609, %v600, %v608
    %vm612 = vcmask 15360
    %613 = vst.msk [vmem:[%s3] sm:$0xff] %vm612, %v610
    %614 = vst.msk [vmem:[%s3 + $0x8] sm:$0xff] %vm612, %v611
    // Predicated region
    $region10: #{tpu_custom_call.1} parent=1 // pred_check
      _
    $region11: #{tpu_custom_call.1} parent=1 // pred_check_branch
      %616 = sbr.rel (0) target = $region13
    $region12: #{tpu_custom_call.1} parent=1 // pred_region
      %618 = vsyncadd [#allocation3], 0
      %s619 = sshll.u32 [#allocation2], 4
      %s620 = int_to_ptr.vmem [resolvable:$true] %s619
      %s621 = sshll.u32 %s2, 4
      %s622 = int_to_ptr.hbm [resolvable:$true] %s621
      %627 = dma.vmem_to_hbm [thread:$0]  %s620, 256, %s622, [#allocation3], 128, 128, 8
    $region13: #{tpu_custom_call.1} parent=1 // pred_fallthru
      _
    // Predicated region
    $region14: #{tpu_custom_call.1} parent=1 // pred_check
      _
    $region15: #{tpu_custom_call.1} parent=1 // pred_check_branch
      %629 = sbr.rel (0) target = $region17
    $region16: #{tpu_custom_call.1} parent=1 // pred_region
      _
    $region17: #{tpu_custom_call.1} parent=1 // pred_fallthru
      _
    // Predicated region
    $region18: #{tpu_custom_call.1} parent=1 // pred_check
      _
    $region19: #{tpu_custom_call.1} parent=1 // pred_check_branch
      %631 = sbr.rel (0) target = $region21
    $region20: #{tpu_custom_call.1} parent=1 // pred_region
      %633 = dma.done [#allocation3], 256
    $region21: #{tpu_custom_call.1} parent=1 // pred_fallthru
      _
    // Predicated region
    $region22: #{tpu_custom_call.1} parent=1 // pred_check
      _
    $region23: #{tpu_custom_call.1} parent=1 // pred_check_branch
      %635 = sbr.rel (0) target = $region25
    $region24: #{tpu_custom_call.1} parent=1 // pred_region
      _
    $region25: #{tpu_custom_call.1} parent=1 // pred_fallthru
      _
    %636 = vsyncpa [#allocation3], 1

</llo_original>
